<compile_context>
chip_gen: v5e
topology: v5e:2x2
jax: 0.10.0
libtpu: 0.0.40
codegen_flags: <defaults>
</compile_context>

<pallas_src>
import functools

import jax
import jax.numpy as jnp
from jax.experimental import pallas as pl
from jax.experimental.pallas import tpu as pltpu


def _bn_reduce_kernel(x_ref, sum_ref, sumsq_ref, *, n_rows, tile_rows):
    """Phase 0: accumulate per-(folded-)channel sum and sum of squares."""
    i = pl.program_id(0)

    @pl.when(i == 0)
    def _():
        sum_ref[...] = jnp.zeros_like(sum_ref)
        sumsq_ref[...] = jnp.zeros_like(sumsq_ref)

    x = x_ref[...].astype(jnp.float32)
    if n_rows % tile_rows != 0:
        # Mask out-of-bounds rows of the (only) partial last tile so they do not
        # bias the accumulated statistics.
        rows = jax.lax.broadcasted_iota(jnp.int32, (tile_rows, 1), 0)
        valid = rows < (n_rows - i * tile_rows)
        x = jnp.where(valid, x, 0.0)

    sum_ref[...] += jnp.sum(x, axis=0, keepdims=True)
    sumsq_ref[...] += jnp.sum(x * x, axis=0, keepdims=True)


def _bn_norm_kernel(x_ref, scale_ref, shift_ref, o_ref):
    """Phase 1: y = x * scale + shift (fused per-channel affine normalize)."""
    x = x_ref[...].astype(jnp.float32)
    o_ref[...] = (x * scale_ref[...] + shift_ref[...]).astype(o_ref.dtype)


def _pick_tile_rows(n_rows, c_f, itemsize, target_bytes=2 << 20, max_rows=4096):
    """Largest row tile <= ~target_bytes per buffer, multiple of 8 (sublane)."""
    bytes_per_row = max(1, c_f * itemsize)
    tn = min(max_rows, max(8, target_bytes // bytes_per_row))
    tn = max(8, (tn // 8) * 8)
    if n_rows <= tn:
        return n_rows  # single full-extent block (no (8,128) constraint)
    return tn


def tbatchnorm1d(vec, gamma, beta, eps=1e-5, tile_rows=None):
    """vec: (B, T, C); gamma/beta: (C,). Returns (B, T, C)."""
    B, T, C = vec.shape
    N = B * T
    x2d = vec.reshape(N, C)

    # Lane-dense fold: pack k rows into the 128-wide lane dim when C < 128.
    if C < 128 and 128 % C == 0:
        k = 128 // C
    else:
        k = 1
    N1 = ((N + k - 1) // k) * k
    if N1 != N:
        x2d = jnp.pad(x2d, ((0, N1 - N), (0, 0)))  # zero rows: no effect on sums
    Nf = N1 // k
    Cf = k * C
    xf = x2d.reshape(Nf, Cf)

    itemsize = jnp.dtype(vec.dtype).itemsize
    if tile_rows is None:
        tile_rows = _pick_tile_rows(Nf, Cf, itemsize)
    TN = min(tile_rows, Nf)
    num_tiles = pl.cdiv(Nf, TN)

    vmem_limit = 32 * 1024 * 1024  # safe on v5e/v6e/v7x; raises v5e's 16 MiB default

    # ---- Phase 0: per-channel sum / sum-of-squares reduction -------------------
    sum_f, sumsq_f = pl.pallas_call(
        functools.partial(_bn_reduce_kernel, n_rows=Nf, tile_rows=TN),
        out_shape=(
            jax.ShapeDtypeStruct((1, Cf), jnp.float32),
            jax.ShapeDtypeStruct((1, Cf), jnp.float32),
        ),
        grid=(num_tiles,),
        in_specs=[pl.BlockSpec((TN, Cf), lambda i: (i, 0))],
        out_specs=(
            pl.BlockSpec((1, Cf), lambda i: (0, 0)),  # VMEM-resident accumulator
            pl.BlockSpec((1, Cf), lambda i: (0, 0)),
        ),
        compiler_params=pltpu.CompilerParams(
            dimension_semantics=("arbitrary",),
            vmem_limit_bytes=vmem_limit,
        ),
    )(xf)

    # ---- Tiny (C,)-sized finalize: mean/var -> fused scale/shift ----------------
    s = sum_f.reshape(k, C).sum(axis=0)
    ss = sumsq_f.reshape(k, C).sum(axis=0)
    mean = s / N                                   # true N (padded rows are zero)
    var = jnp.maximum(ss / N - mean * mean, 0.0)   # biased variance (PyTorch BN)
    inv_std = jax.lax.rsqrt(var + eps)
    scale = gamma.astype(jnp.float32) * inv_std
    shift = beta.astype(jnp.float32) - mean * scale
    scale_f = jnp.tile(scale, k).reshape(1, Cf)
    shift_f = jnp.tile(shift, k).reshape(1, Cf)

    # ---- Phase 1: stream-normalize (row tiles independent -> "parallel") --------
    out_f = pl.pallas_call(
        _bn_norm_kernel,
        out_shape=jax.ShapeDtypeStruct((Nf, Cf), vec.dtype),
        grid=(num_tiles,),
        in_specs=[
            pl.BlockSpec((TN, Cf), lambda i: (i, 0)),
            pl.BlockSpec((1, Cf), lambda i: (0, 0)),
            pl.BlockSpec((1, Cf), lambda i: (0, 0)),
        ],
        out_specs=pl.BlockSpec((TN, Cf), lambda i: (i, 0)),
        compiler_params=pltpu.CompilerParams(
            dimension_semantics=("parallel",),
            vmem_limit_bytes=vmem_limit,
        ),
    )(xf, scale_f, shift_f)

    out2d = out_f.reshape(N1, C)
    if N1 != N:
        out2d = out2d[:N]
    return out2d.reshape(B, T, C)


def _reference(vec, gamma, beta, eps=1e-5):
    x = vec.astype(jnp.float32)
    mean = x.mean(axis=(0, 1), keepdims=True)
    var = ((x - mean) ** 2).mean(axis=(0, 1), keepdims=True)
    return (x - mean) / jnp.sqrt(var + eps) * gamma + beta


if __name__ == "__main__":
    # Shapes implied by the module: vec is (batch, seq, dim), dim = BatchNorm1d channels.
    B, T, C = 2, 8, 32

    key = jax.random.PRNGKey(0)
    vec = jax.random.normal(key, (B, T, C), dtype=jnp.float32)
    gamma = jnp.ones((C,), dtype=jnp.float32)   # nn.BatchNorm1d init: weight=1
    beta = jnp.zeros((C,), dtype=jnp.float32)   # bias=0

    out = jax.block_until_ready(tbatchnorm1d(vec, gamma, beta))
    ref = _reference(vec, gamma, beta)
    assert jnp.max(jnp.abs(out - ref)) < 1e-4, "mismatch vs reference (base case)"

    # Extra small check: multi-tile path with a partial last row tile (masking).
    vec2 = jax.random.normal(jax.random.PRNGKey(0), (2, 50, 32), dtype=jnp.float32)
    out2 = jax.block_until_ready(tbatchnorm1d(vec2, gamma, beta, tile_rows=8))
    ref2 = _reference(vec2, gamma, beta)
    assert jnp.max(jnp.abs(out2 - ref2)) < 1e-4, "mismatch vs reference (tiled case)"

    # Extra small check: row count not divisible by the lane-fold factor k=4.
    vec3 = jax.random.normal(jax.random.PRNGKey(0), (3, 7, 32), dtype=jnp.float32)
    out3 = jax.block_until_ready(tbatchnorm1d(vec3, gamma, beta))
    ref3 = _reference(vec3, gamma, beta)
    assert jnp.max(jnp.abs(out3 - ref3)) < 1e-4, "mismatch vs reference (padded case)"

    print("KERNEL_OK")
</pallas_src>

<mosaic_0001>
module attributes {stable_mosaic.version = 11 : i64} {
  func.func @_bn_reduce_kernel(%arg0: i32, %arg1: memref<4x128xf32, #tpu.memory_space<vmem>>, %arg2: memref<1x128xf32, #tpu.memory_space<vmem>>, %arg3: memref<1x128xf32, #tpu.memory_space<vmem>>) attributes {dimension_semantics = [#tpu.dimension_semantics<arbitrary>], iteration_bounds = array<i64: 1>, scalar_prefetch = 0 : i64, scratch_operands = 0 : i64, tpu.core_type = #tpu.core_type<tc>, window_params = [{transform_indices = @transform_0, window_bounds = array<i64: 4, 128>}, {pipeline_mode = #tpu.pipeline_mode<synchronous>, transform_indices = @transform_1, window_bounds = array<i64: 1, 128>}, {pipeline_mode = #tpu.pipeline_mode<synchronous>, transform_indices = @transform_2, window_bounds = array<i64: 1, 128>}]} {
    %c0_i32 = arith.constant 0 : i32
    %0 = arith.cmpi eq, %arg0, %c0_i32 : i32
    %1 = arith.extui %0 : i1 to i32
    %c0_i32_0 = arith.constant 0 : i32
    %2 = arith.cmpi ne, %1, %c0_i32_0 : i32
    scf.if %2 {
      %cst_11 = arith.constant 0.000000e+00 : f32
      %15 = vector.broadcast %cst_11 : f32 to vector<1x128xf32>
      %c0_12 = arith.constant 0 : index
      %c0_13 = arith.constant 0 : index
      %16 = vector.load %arg2[%c0_12, %c0_13] : memref<1x128xf32, #tpu.memory_space<vmem>>, vector<1x128xf32>
      tpu.vector_store %arg2[%c0_12, %c0_13], %15 {strides = array<i32>} : memref<1x128xf32, #tpu.memory_space<vmem>>, vector<1x128xf32>,
      %cst_14 = arith.constant 0.000000e+00 : f32
      %17 = vector.broadcast %cst_14 : f32 to vector<1x128xf32>
      %c0_15 = arith.constant 0 : index
      %c0_16 = arith.constant 0 : index
      %18 = vector.load %arg3[%c0_15, %c0_16] : memref<1x128xf32, #tpu.memory_space<vmem>>, vector<1x128xf32>
      tpu.vector_store %arg3[%c0_15, %c0_16], %17 {strides = array<i32>} : memref<1x128xf32, #tpu.memory_space<vmem>>, vector<1x128xf32>,
    } else {
    }
    %c0 = arith.constant 0 : index
    %c0_1 = arith.constant 0 : index
    %3 = vector.load %arg1[%c0, %c0_1] : memref<4x128xf32, #tpu.memory_space<vmem>>, vector<4x128xf32>
    %c0_2 = arith.constant 0 : index
    %c0_3 = arith.constant 0 : index
    %4 = vector.load %arg2[%c0_2, %c0_3] : memref<1x128xf32, #tpu.memory_space<vmem>>, vector<1x128xf32>
    %cst = arith.constant dense<0.000000e+00> : vector<128xf32>
    %5 = vector.multi_reduction <add>, %3, %cst [0] : vector<4x128xf32> to vector<128xf32>
    %6 = vector.shape_cast %5 : vector<128xf32> to vector<1x128xf32>
    %7 = arith.addf %4, %6 : vector<1x128xf32>
    %c0_4 = arith.constant 0 : index
    %c0_5 = arith.constant 0 : index
    %8 = vector.load %arg2[%c0_4, %c0_5] : memref<1x128xf32, #tpu.memory_space<vmem>>, vector<1x128xf32>
    tpu.vector_store %arg2[%c0_4, %c0_5], %7 {strides = array<i32>} : memref<1x128xf32, #tpu.memory_space<vmem>>, vector<1x128xf32>,
    %c0_6 = arith.constant 0 : index
    %c0_7 = arith.constant 0 : index
    %9 = vector.load %arg3[%c0_6, %c0_7] : memref<1x128xf32, #tpu.memory_space<vmem>>, vector<1x128xf32>
    %10 = arith.mulf %3, %3 : vector<4x128xf32>
    %cst_8 = arith.constant dense<0.000000e+00> : vector<128xf32>
    %11 = vector.multi_reduction <add>, %10, %cst_8 [0] : vector<4x128xf32> to vector<128xf32>
    %12 = vector.shape_cast %11 : vector<128xf32> to vector<1x128xf32>
    %13 = arith.addf %9, %12 : vector<1x128xf32>
    %c0_9 = arith.constant 0 : index
    %c0_10 = arith.constant 0 : index
    %14 = vector.load %arg3[%c0_9, %c0_10] : memref<1x128xf32, #tpu.memory_space<vmem>>, vector<1x128xf32>
    tpu.vector_store %arg3[%c0_9, %c0_10], %13 {strides = array<i32>} : memref<1x128xf32, #tpu.memory_space<vmem>>, vector<1x128xf32>,
    return
  }
  func.func @transform_0(%arg0: i32) -> (i32, i32) {
    %c0_i32 = arith.constant 0 : i32
    %c0_i32_0 = arith.constant 0 : i32
    return %arg0, %c0_i32 : i32, i32
  }
  func.func @transform_1(%arg0: i32) -> (i32, i32) {
    %c0_i32 = arith.constant 0 : i32
    %c0_i32_0 = arith.constant 0 : i32
    %c0_i32_1 = arith.constant 0 : i32
    return %c0_i32, %c0_i32_0 : i32, i32
  }
  func.func @transform_2(%arg0: i32) -> (i32, i32) {
    %c0_i32 = arith.constant 0 : i32
    %c0_i32_0 = arith.constant 0 : i32
    %c0_i32_1 = arith.constant 0 : i32
    return %c0_i32, %c0_i32_0 : i32, i32
  }
}

</mosaic_0001>

<llo_original>
// kernel: tpu_custom_call.1
$region0: #{tpu_custom_call.1}
  #allocation0 [shape = 'u32[]', space=smem, size = 0x4, offset = 0x4, fixed_abs, tag = 'smem constant byte address 0x4 - core index']
  #allocation1 [shape = 'u32[72,128]{1,0:T(1,128)}', space=vmem, size = 0x9000, scoped, tag = 'internal scratch']
  %s0 = inlined_call_operand.hbm [shape: f32[4,128], index: 0, kind: input, shape index: {}]
  %s1 = inlined_call_operand.hbm [shape: f32[1,128], index: 1, kind: output, shape index: {0}]
  %s2 = inlined_call_operand.hbm [shape: f32[1,128], index: 2, kind: output, shape index: {1}]
  %3 = xla_tuple %s1, %s2
  %s4 = sld [smem:[#allocation0]]
  $region30: #{tpu_custom_call.1} parent=0
    _
  %s6 = ssub.s32 1, %s4
  %s7 = scalar_select 0, %s6, %s4
  $region1: #{tpu_custom_call.1} parent=0
    #allocation2 [shape = 'u8[2048]{0}', space=vmem, size = 0x800, scoped, tag = 'input window, operand 0, single buffered']
    #allocation3 [shape = 's32[1]{0}', space=sflag, size = 0x4, scoped, tag = 'scoped memory for tpu_custom_call.1']
    #allocation4 [shape = 's32[1]{0}', space=sflag, size = 0x4, scoped, tag = 'scoped memory for tpu_custom_call.1']
    #allocation5 [shape = 'u8[512]{0}', space=vmem, size = 0x400, scoped, tag = 'output window, operand 0, single buffered']
    #allocation6 [shape = 'u8[512]{0}', space=vmem, size = 0x400, scoped, tag = 'output window, operand 1, single buffered']
    #allocation7 [shape = 's32[1]{0}', space=sflag, size = 0x4, scoped, tag = 'scoped memory for tpu_custom_call.1']
    %8 = vsyncpa [#allocation3], 0
    %9 = vsyncpa [#allocation4], 0
    %10 = vsyncpa [#allocation7], 0
    // Predicated region
    $region2: #{tpu_custom_call.1} parent=1 // pred_check
      _
    $region3: #{tpu_custom_call.1} parent=1 // pred_check_branch
      %12 = sbr.rel (0) target = $region5
    $region4: #{tpu_custom_call.1} parent=1 // pred_region
      %14 = vsyncadd [#allocation3], 0
      %s16 = sshll.u32 %s0, 4
      %s17 = int_to_ptr.hbm [resolvable:$true] %s16
      %s18 = sshll.u32 [#allocation2], 4
      %s19 = int_to_ptr.vmem [resolvable:$true] %s18
      %21 = dma.hbm_to_vmem [thread:$0]  %s17, 64, %s19, [#allocation3]
    $region5: #{tpu_custom_call.1} parent=1 // pred_fallthru
      _
    // Predicated region
    $region6: #{tpu_custom_call.1} parent=1 // pred_check
      _
    $region7: #{tpu_custom_call.1} parent=1 // pred_check_branch
      %23 = sbr.rel (0) target = $region9
    $region8: #{tpu_custom_call.1} parent=1 // pred_region
      %25 = dma.done [#allocation3], 64
    $region9: #{tpu_custom_call.1} parent=1 // pred_fallthru
      _
    %p26 = scmp.eq.s32.totalorder 0, 0
    // Predicated region
    $region10: #{tpu_custom_call.1} parent=1 // pred_check
      %p27 = pneg %p26
    $region11: #{tpu_custom_call.1} parent=1 // pred_check_branch
      %29 = sbr.rel (%p27) target = $region13
    $region12: #{tpu_custom_call.1} parent=1 // pred_region
      %30 = vst [vmem:[#allocation5] sm:$0x1] 0.0
      %31 = vst [vmem:[#allocation6] sm:$0x1] 0.0
    $region13: #{tpu_custom_call.1} parent=1 // pred_fallthru
      _
    %v32 = vld [vmem:[#allocation2] sm:$0xf]
    %v33 = vld [vmem:[#allocation5] sm:$0x1]
    %vm34 = vcmask 1043456
    %v35 = vsel %vm34, %v32, 0.0
    %v36 = vrot.slane %v35, 4
    %v37 = vadd.f32 %v35, %v36
    %v38 = vrot.slane %v37, 2
    %v39 = vadd.f32 %v37, %v38
    %v40 = vrot.slane %v39, 1
    %v41 = vadd.f32 %v39, %v40
    %v42 = vadd.f32 %v33, %v41
    %43 = vst [vmem:[#allocation5] sm:$0x1] %v42
    %v44 = vld [vmem:[#allocation6] sm:$0x1]
    %v45 = vmul.f32 %v32, %v32
    %v46 = vsel %vm34, %v45, 0.0
    %v47 = vrot.slane %v46, 4
    %v48 = vadd.f32 %v46, %v47
    %v49 = vrot.slane %v48, 2
    %v50 = vadd.f32 %v48, %v49
    %v51 = vrot.slane %v50, 1
    %v52 = vadd.f32 %v50, %v51
    %v53 = vadd.f32 %v44, %v52
    %54 = vst [vmem:[#allocation6] sm:$0x1] %v53
    // Predicated region
    $region14: #{tpu_custom_call.1} parent=1 // pred_check
      _
    $region15: #{tpu_custom_call.1} parent=1 // pred_check_branch
      %56 = sbr.rel (0) target = $region17
    $region16: #{tpu_custom_call.1} parent=1 // pred_region
      %58 = vsyncadd [#allocation4], 0
      %s60 = sshll.u32 [#allocation5], 4
      %s61 = int_to_ptr.vmem [resolvable:$true] %s60
      %s62 = sshll.u32 %s1, 4
      %s63 = int_to_ptr.hbm [resolvable:$true] %s62
      %65 = dma.vmem_to_hbm [thread:$0]  %s61, 16, %s63, [#allocation4]
    $region17: #{tpu_custom_call.1} parent=1 // pred_fallthru
      _
    // Predicated region
    $region18: #{tpu_custom_call.1} parent=1 // pred_check
      _
    $region19: #{tpu_custom_call.1} parent=1 // pred_check_branch
      %67 = sbr.rel (0) target = $region21
    $region20: #{tpu_custom_call.1} parent=1 // pred_region
      %69 = vsyncadd [#allocation7], 0
      %s71 = sshll.u32 [#allocation6], 4
      %s72 = int_to_ptr.vmem [resolvable:$true] %s71
      %s73 = sshll.u32 %s2, 4
      %s74 = int_to_ptr.hbm [resolvable:$true] %s73
      %76 = dma.vmem_to_hbm [thread:$0]  %s72, 16, %s74, [#allocation7]
    $region21: #{tpu_custom_call.1} parent=1 // pred_fallthru
      _
    // Predicated region
    $region22: #{tpu_custom_call.1} parent=1 // pred_check
      _
    $region23: #{tpu_custom_call.1} parent=1 // pred_check_branch
      %78 = sbr.rel (0) target = $region25
    $region24: #{tpu_custom_call.1} parent=1 // pred_region
      %80 = dma.done [#allocation4], 16
    $region25: #{tpu_custom_call.1} parent=1 // pred_fallthru
      _
    // Predicated region
    $region26: #{tpu_custom_call.1} parent=1 // pred_check
      _
    $region27: #{tpu_custom_call.1} parent=1 // pred_check_branch
      %82 = sbr.rel (0) target = $region29
    $region28: #{tpu_custom_call.1} parent=1 // pred_region
      %84 = dma.done [#allocation7], 16
    $region29: #{tpu_custom_call.1} parent=1 // pred_fallthru
      _
    %85 = vsyncpa [#allocation3], 1
    %86 = vsyncpa [#allocation4], 1
    %87 = vsyncpa [#allocation7], 1

</llo_original>
